<compile_context>
chip_gen: v6e
topology: v6e:2x2x1
jax: 0.10.0
libtpu: 0.0.40
codegen_flags: <defaults>
</compile_context>

<pallas_src>
import functools

import jax
import jax.numpy as jnp
from jax.experimental import pallas as pl
from jax.experimental.pallas import tpu as pltpu


def _round_up(x, m):
    return ((x + m - 1) // m) * m


def _ranking_loss_kernel(x_ref, sig_ref, sigy_ref, lbl_ref, cls_ref,
                         out_ref, gt_ref, acc_ref, *, margin):
    # x_ref:    (tb, Dp)  bf16   embeddings tile
    # sig_ref:  (Dp, tc)  bf16   train_sig[:, train_classes] column tile
    # sigy_ref: (tb, Dp)  bf16   train_sig[:, y_j] per-row ground-truth sigs
    # lbl_ref:  (tb, 1)   i32    labels (-1 on padded rows)
    # cls_ref:  (1, tc)   i32    train_classes values (-1 on padded cols)
    # out_ref:  (tb, 128) f32    per-B-tile lane-dense partial sums
    # gt_ref:   (tb, 1)   f32    scratch: ground-truth scores (per B-tile)
    # acc_ref:  (tb, 128) f32    scratch: running hinge sum (per B-tile)
    c_idx = pl.program_id(1)
    n_c = pl.num_programs(1)

    @pl.when(c_idx == 0)
    def _():
        # gt[j] = <x_j, sig[:, y_j]>, computed once per B-tile in f32.
        xf = x_ref[...].astype(jnp.float32)
        sy = sigy_ref[...].astype(jnp.float32)
        gt_ref[...] = jnp.sum(xf * sy, axis=1, keepdims=True)
        acc_ref[...] = jnp.zeros_like(acc_ref)

    # All-pairs class scores on the MXU: bf16 operands, f32 accumulation.
    scores = jnp.dot(x_ref[...], sig_ref[...],
                     preferred_element_type=jnp.float32)           # (tb, tc)

    labels = lbl_ref[...]                                          # (tb, 1)
    classes = cls_ref[...]                                         # (1, tc)

    # Exclude the ground-truth class (by VALUE) and any padded row/column.
    valid = (classes != labels) & (classes >= 0) & (labels >= 0)   # (tb, tc)

    hinge = jnp.where(
        valid,
        jnp.maximum(jnp.float32(margin) + scores - gt_ref[...], 0.0),
        jnp.float32(0.0),
    )                                                              # (tb, tc)

    # Accumulate into the lane-wide accumulator with pure VPU adds
    # (static, lane-aligned 128-wide slices; no per-step cross-lane reduce).
    tc = hinge.shape[1]
    part = acc_ref[...]
    for k in range(tc // 128):
        part = part + hinge[:, k * 128:(k + 1) * 128]
    acc_ref[...] = part

    @pl.when(c_idx == n_c - 1)
    def _():
        out_ref[...] = acc_ref[...]


def ranking_loss(pred_embedding, batch_label, train_classes, train_sig, margin,
                 *, tb_max=256, tc_max=1024):
    """Pallas TPU implementation of RankingLoss.forward. Returns a scalar f32."""
    B, D = pred_embedding.shape
    C = int(train_classes.shape[0])

    classes = train_classes.astype(jnp.int32)                      # (C,)
    labels = batch_label.astype(jnp.int32)                         # (B,)
    sig_f32 = train_sig.astype(jnp.float32)

    # Gather the ranked columns (train_sig[:, train_classes[c]]) and the
    # per-row ground-truth columns (train_sig[:, y_j]) with XLA; this fixes
    # the index-vs-value mismatch and removes the O(B*C) one-hot gather.
    sig_sel = jnp.take(sig_f32, classes, axis=1)                   # (D, C)
    sig_y = jnp.take(sig_f32, labels, axis=1).T                    # (B, D)

    # bf16 MXU operands; epilogue math stays f32 inside the kernel.
    x_bf = pred_embedding.astype(jnp.bfloat16)
    sig_bf = sig_sel.astype(jnp.bfloat16)
    sigy_bf = sig_y.astype(jnp.bfloat16)

    # Tile sizes: sublane-aligned tb, lane-aligned tc and D.
    tb = min(tb_max, _round_up(B, 8))
    tc = min(tc_max, _round_up(C, 128))
    Dp = _round_up(D, 128)
    Bp = _round_up(B, tb)
    Cp = _round_up(C, tc)

    # Pad; sentinel -1 on labels/classes marks padded rows/columns.
    x_p = jnp.zeros((Bp, Dp), jnp.bfloat16).at[:B, :D].set(x_bf)
    sig_p = jnp.zeros((Dp, Cp), jnp.bfloat16).at[:D, :C].set(sig_bf)
    sigy_p = jnp.zeros((Bp, Dp), jnp.bfloat16).at[:B, :D].set(sigy_bf)
    lbl_p = jnp.full((Bp, 1), -1, jnp.int32).at[:B, 0].set(labels)
    cls_p = jnp.full((1, Cp), -1, jnp.int32).at[0, :C].set(classes)

    n_bt = Bp // tb
    n_ct = Cp // tc

    kernel = functools.partial(_ranking_loss_kernel, margin=float(margin))

    bytes_accessed = ((x_p.size + sig_p.size + sigy_p.size) * 2
                      + (lbl_p.size + cls_p.size) * 4
                      + Bp * 128 * 4)

    out = pl.pallas_call(
        kernel,
        out_shape=jax.ShapeDtypeStruct((Bp, 128), jnp.float32),
        grid_spec=pltpu.PrefetchScalarGridSpec(
            num_scalar_prefetch=0,
            grid=(n_bt, n_ct),
            in_specs=[
                pl.BlockSpec((tb, Dp), lambda i, c: (i, 0)),   # x
                pl.BlockSpec((Dp, tc), lambda i, c: (0, c)),   # sig columns
                pl.BlockSpec((tb, Dp), lambda i, c: (i, 0)),   # gt signatures
                pl.BlockSpec((tb, 1), lambda i, c: (i, 0)),    # labels
                pl.BlockSpec((1, tc), lambda i, c: (0, c)),    # class values
            ],
            out_specs=pl.BlockSpec((tb, 128), lambda i, c: (i, 0)),
            scratch_shapes=[
                pltpu.VMEM((tb, 1), jnp.float32),              # gt scratch
                pltpu.VMEM((tb, 128), jnp.float32),            # accumulator
            ],
        ),
        compiler_params=pltpu.CompilerParams(
            dimension_semantics=("parallel", "arbitrary"),
            # Headroom-safe on v7x (64 MiB physical); well within v5e/v6e.
            vmem_limit_bytes=48 * 1024 * 1024,
        ),
        cost_estimate=pl.CostEstimate(
            flops=2 * Bp * Cp * Dp,
            transcendentals=0,
            bytes_accessed=int(bytes_accessed),
        ),
    )(x_p, sig_p, sigy_p, lbl_p, cls_p)

    return jnp.sum(out)


def _ranking_loss_ref(pred_embedding, batch_label, train_classes, train_sig, margin):
    """Pure-JAX mirror of the PyTorch double loop (f32)."""
    x = jnp.asarray(pred_embedding, jnp.float32)
    sig = jnp.asarray(train_sig, jnp.float32)
    loss = jnp.float32(0.0)
    for j in range(x.shape[0]):
        y_n = int(batch_label[j])
        xw = x[j]
        gt = jnp.dot(xw, sig[:, y_n])
        for cls in [int(v) for v in train_classes]:
            if cls == y_n:
                continue
            tmp = margin + jnp.dot(xw, sig[:, cls]) - gt
            loss = loss + jnp.maximum(tmp, 0.0)
    return loss


if __name__ == "__main__":
    key = jax.random.PRNGKey(0)
    k1, k2, k3, k4 = jax.random.split(key, 4)

    B, D = 8, 32
    n_total_classes = 24        # columns in train_sig
    C = 16                      # number of ranked train classes
    margin = 1.0

    pred_embedding = jax.random.normal(k1, (B, D), dtype=jnp.float32)
    train_sig = jax.random.normal(k2, (D, n_total_classes), dtype=jnp.float32)
    # train_classes are class ids (column indices of train_sig), deliberately
    # NOT arange(C), to exercise the value-vs-index handling.
    train_classes = jax.random.permutation(k3, n_total_classes)[:C].astype(jnp.int32)
    # Batch labels are drawn from the training classes (as in the torch code).
    batch_label = train_classes[jax.random.randint(k4, (B,), 0, C)]

    loss = ranking_loss(pred_embedding, batch_label, train_classes, train_sig, margin)
    loss = jax.block_until_ready(loss)

    # Tight check: same double loop on bf16-rounded inputs (the kernel feeds
    # bf16 to the MXU per the performance review, accumulating in f32).
    x_r = pred_embedding.astype(jnp.bfloat16).astype(jnp.float32)
    sig_r = train_sig.astype(jnp.bfloat16).astype(jnp.float32)
    ref_bf16 = _ranking_loss_ref(x_r, batch_label, train_classes, sig_r, margin)
    assert jnp.allclose(loss, ref_bf16, rtol=1e-3, atol=1e-2), (loss, ref_bf16)

    # Loose check against the full-f32 PyTorch-equivalent reference.
    ref_f32 = _ranking_loss_ref(pred_embedding, batch_label, train_classes,
                                train_sig, margin)
    assert jnp.allclose(loss, ref_f32, rtol=5e-2, atol=2.0), (loss, ref_f32)

    print("KERNEL_OK")
</pallas_src>

<mosaic_0001>
module attributes {stable_mosaic.version = 11 : i64} {
  func.func @_ranking_loss_kernel(%arg0: i32, %arg1: i32, %arg2: memref<8x128xbf16, #tpu.memory_space<vmem>>, %arg3: memref<128x128xbf16, #tpu.memory_space<vmem>>, %arg4: memref<8x128xbf16, #tpu.memory_space<vmem>>, %arg5: memref<8x1xi32, #tpu.memory_space<vmem>>, %arg6: memref<1x128xi32, #tpu.memory_space<vmem>>, %arg7: memref<8x128xf32, #tpu.memory_space<vmem>>, %arg8: memref<8x1xf32, #tpu.memory_space<vmem>>, %arg9: memref<8x128xf32, #tpu.memory_space<vmem>>) attributes {dimension_semantics = [#tpu.dimension_semantics<parallel>, #tpu.dimension_semantics<arbitrary>], iteration_bounds = array<i64: 1, 1>, scalar_prefetch = 0 : i64, scratch_operands = 2 : i64, tpu.core_type = #tpu.core_type<tc>, window_params = [{transform_indices = @transform_0, window_bounds = array<i64: 8, 128>}, {transform_indices = @transform_1, window_bounds = array<i64: 128, 128>}, {transform_indices = @transform_2, window_bounds = array<i64: 8, 128>}, {transform_indices = @transform_3, window_bounds = array<i64: 8, 1>}, {transform_indices = @transform_4, window_bounds = array<i64: 1, 128>}, {transform_indices = @transform_5, window_bounds = array<i64: 8, 128>}]} {
    %c0_i32 = arith.constant 0 : i32
    %0 = arith.cmpi eq, %arg1, %c0_i32 : i32
    %1 = arith.extui %0 : i1 to i32
    %c0_i32_0 = arith.constant 0 : i32
    %2 = arith.cmpi ne, %1, %c0_i32_0 : i32
    scf.if %2 {
      %c0_21 = arith.constant 0 : index
      %c0_22 = arith.constant 0 : index
      %34 = vector.load %arg2[%c0_21, %c0_22] : memref<8x128xbf16, #tpu.memory_space<vmem>>, vector<8x128xbf16>
      %35 = arith.extf %34 : vector<8x128xbf16> to vector<8x128xf32>
      %c0_23 = arith.constant 0 : index
      %c0_24 = arith.constant 0 : index
      %36 = vector.load %arg4[%c0_23, %c0_24] : memref<8x128xbf16, #tpu.memory_space<vmem>>, vector<8x128xbf16>
      %37 = arith.extf %36 : vector<8x128xbf16> to vector<8x128xf32>
      %38 = arith.mulf %35, %37 : vector<8x128xf32>
      %cst_25 = arith.constant dense<0.000000e+00> : vector<8xf32>
      %39 = vector.multi_reduction <add>, %38, %cst_25 [1] : vector<8x128xf32> to vector<8xf32>
      %40 = vector.shape_cast %39 : vector<8xf32> to vector<8x1xf32>
      %c0_26 = arith.constant 0 : index
      %c0_27 = arith.constant 0 : index
      %41 = vector.load %arg8[%c0_26, %c0_27] : memref<8x1xf32, #tpu.memory_space<vmem>>, vector<8x1xf32>
      tpu.vector_store %arg8[%c0_26, %c0_27], %40 {strides = array<i32>} : memref<8x1xf32, #tpu.memory_space<vmem>>, vector<8x1xf32>,
      %cst_28 = arith.constant 0.000000e+00 : f32
      %42 = vector.broadcast %cst_28 : f32 to vector<8x128xf32>
      %c0_29 = arith.constant 0 : index
      %c0_30 = arith.constant 0 : index
      %43 = vector.load %arg9[%c0_29, %c0_30] : memref<8x128xf32, #tpu.memory_space<vmem>>, vector<8x128xf32>
      tpu.vector_store %arg9[%c0_29, %c0_30], %42 {strides = array<i32>} : memref<8x128xf32, #tpu.memory_space<vmem>>, vector<8x128xf32>,
    } else {
    }
    %c0 = arith.constant 0 : index
    %c0_1 = arith.constant 0 : index
    %3 = vector.load %arg2[%c0, %c0_1] : memref<8x128xbf16, #tpu.memory_space<vmem>>, vector<8x128xbf16>
    %c0_2 = arith.constant 0 : index
    %c0_3 = arith.constant 0 : index
    %4 = vector.load %arg3[%c0_2, %c0_3] : memref<128x128xbf16, #tpu.memory_space<vmem>>, vector<128x128xbf16>
    %cst = arith.constant dense<0.000000e+00> : vector<8x128xf32>
    %5 = tpu.matmul %3, %4, %cst {dimension_numbers = #tpu.dot_dimension_numbers<[1], [0], [0], [1], [0, 0, 1, 1], [], []>} : vector<8x128xbf16>, vector<128x128xbf16>, vector<8x128xf32> -> vector<8x128xf32>
    %c0_4 = arith.constant 0 : index
    %c0_5 = arith.constant 0 : index
    %6 = vector.load %arg5[%c0_4, %c0_5] : memref<8x1xi32, #tpu.memory_space<vmem>>, vector<8x1xi32>
    %c0_6 = arith.constant 0 : index
    %c0_7 = arith.constant 0 : index
    %7 = vector.load %arg6[%c0_6, %c0_7] : memref<1x128xi32, #tpu.memory_space<vmem>>, vector<1x128xi32>
    %8 = vector.broadcast %7 : vector<1x128xi32> to vector<8x128xi32>
    %9 = vector.broadcast %6 : vector<8x1xi32> to vector<8x128xi32>
    %10 = arith.cmpi ne, %8, %9 : vector<8x128xi32>
    %c0_i32_8 = arith.constant 0 : i32
    %11 = vector.broadcast %c0_i32_8 : i32 to vector<1x128xi32>
    %12 = arith.cmpi sge, %7, %11 : vector<1x128xi32>
    %13 = vector.broadcast %12 : vector<1x128xi1> to vector<8x128xi1>
    %14 = arith.andi %10, %13 : vector<8x128xi1>
    %c0_i32_9 = arith.constant 0 : i32
    %15 = vector.broadcast %c0_i32_9 : i32 to vector<8x1xi32>
    %16 = arith.cmpi sge, %6, %15 : vector<8x1xi32>
    %17 = vector.broadcast %16 : vector<8x1xi1> to vector<8x128xi1>
    %18 = arith.andi %14, %17 : vector<8x128xi1>
    %cst_10 = arith.constant 1.000000e+00 : f32
    %19 = vector.broadcast %cst_10 : f32 to vector<8x128xf32>
    %20 = arith.addf %19, %5 : vector<8x128xf32>
    %c0_11 = arith.constant 0 : index
    %c0_12 = arith.constant 0 : index
    %21 = vector.load %arg8[%c0_11, %c0_12] : memref<8x1xf32, #tpu.memory_space<vmem>>, vector<8x1xf32>
    %22 = vector.broadcast %21 : vector<8x1xf32> to vector<8x128xf32>
    %23 = arith.subf %20, %22 : vector<8x128xf32>
    %cst_13 = arith.constant 0.000000e+00 : f32
    %24 = vector.broadcast %cst_13 : f32 to vector<8x128xf32>
    %25 = arith.maximumf %23, %24 : vector<8x128xf32>
    %cst_14 = arith.constant 0.000000e+00 : f32
    %26 = vector.broadcast %cst_14 : f32 to vector<8x128xf32>
    %27 = arith.select %18, %25, %26 : vector<8x128xi1>, vector<8x128xf32>
    %c0_15 = arith.constant 0 : index
    %c0_16 = arith.constant 0 : index
    %28 = vector.load %arg9[%c0_15, %c0_16] : memref<8x128xf32, #tpu.memory_space<vmem>>, vector<8x128xf32>
    %29 = arith.addf %28, %27 : vector<8x128xf32>
    %c0_17 = arith.constant 0 : index
    %c0_18 = arith.constant 0 : index
    %30 = vector.load %arg9[%c0_17, %c0_18] : memref<8x128xf32, #tpu.memory_space<vmem>>, vector<8x128xf32>
    tpu.vector_store %arg9[%c0_17, %c0_18], %29 {strides = array<i32>} : memref<8x128xf32, #tpu.memory_space<vmem>>, vector<8x128xf32>,
    %c0_i32_19 = arith.constant 0 : i32
    %31 = arith.cmpi eq, %arg1, %c0_i32_19 : i32
    %32 = arith.extui %31 : i1 to i32
    %c0_i32_20 = arith.constant 0 : i32
    %33 = arith.cmpi ne, %32, %c0_i32_20 : i32
    scf.if %33 {
      %c0_21 = arith.constant 0 : index
      %c0_22 = arith.constant 0 : index
      %34 = vector.load %arg9[%c0_21, %c0_22] : memref<8x128xf32, #tpu.memory_space<vmem>>, vector<8x128xf32>
      %c0_23 = arith.constant 0 : index
      %c0_24 = arith.constant 0 : index
      %35 = vector.load %arg7[%c0_23, %c0_24] : memref<8x128xf32, #tpu.memory_space<vmem>>, vector<8x128xf32>
      tpu.vector_store %arg7[%c0_23, %c0_24], %34 {strides = array<i32>} : memref<8x128xf32, #tpu.memory_space<vmem>>, vector<8x128xf32>,
    } else {
    }
    return
  }
  func.func @transform_0(%arg0: i32, %arg1: i32) -> (i32, i32) {
    %c0_i32 = arith.constant 0 : i32
    %c0_i32_0 = arith.constant 0 : i32
    return %arg0, %c0_i32 : i32, i32
  }
  func.func @transform_1(%arg0: i32, %arg1: i32) -> (i32, i32) {
    %c0_i32 = arith.constant 0 : i32
    %c0_i32_0 = arith.constant 0 : i32
    return %c0_i32, %arg1 : i32, i32
  }
  func.func @transform_2(%arg0: i32, %arg1: i32) -> (i32, i32) {
    %c0_i32 = arith.constant 0 : i32
    %c0_i32_0 = arith.constant 0 : i32
    return %arg0, %c0_i32 : i32, i32
  }
  func.func @transform_3(%arg0: i32, %arg1: i32) -> (i32, i32) {
    %c0_i32 = arith.constant 0 : i32
    %c0_i32_0 = arith.constant 0 : i32
    return %arg0, %c0_i32 : i32, i32
  }
  func.func @transform_4(%arg0: i32, %arg1: i32) -> (i32, i32) {
    %c0_i32 = arith.constant 0 : i32
    %c0_i32_0 = arith.constant 0 : i32
    return %c0_i32, %arg1 : i32, i32
  }
  func.func @transform_5(%arg0: i32, %arg1: i32) -> (i32, i32) {
    %c0_i32 = arith.constant 0 : i32
    %c0_i32_0 = arith.constant 0 : i32
    return %arg0, %c0_i32 : i32, i32
  }
}

</mosaic_0001>

<llo_original>
// kernel: tpu_custom_call.1
$region0: #{tpu_custom_call.1}
  #allocation0 [shape = 'u32[]', space=smem, size = 0x4, offset = 0x4, fixed_abs, tag = 'smem constant byte address 0x4 - core index']
  #allocation1 [shape = 'u32[144,128]{1,0:T(1,128)}', space=vmem, size = 0x12000, scoped, tag = 'internal scratch']
  #allocation2 [shape = 'f32[8,1]{1,0:T(8,128)}', space=vmem, size = 0x1000, scoped, tag = 'scratch operand']
  #allocation3 [shape = 'f32[8,128]{1,0:T(8,128)}', space=vmem, size = 0x1000, scoped, tag = 'scratch operand']
  %s0 = inlined_call_operand.vmem [shape: bf16[8,128], index: 0, kind: input, shape index: {}]
  %s1 = inlined_call_operand.hbm [shape: bf16[128,128], index: 1, kind: input, shape index: {}]
  %s2 = inlined_call_operand.vmem [shape: bf16[8,128], index: 2, kind: input, shape index: {}]
  %s3 = inlined_call_operand.vmem [shape: s32[8,1], index: 3, kind: input, shape index: {}]
  %s4 = inlined_call_operand.vmem [shape: s32[1,128], index: 4, kind: input, shape index: {}]
  %s5 = inlined_call_operand.hbm [shape: f32[8,128], index: 5, kind: output, shape index: {}]
  %s6 = sld [smem:[#allocation0]]
  $region42: #{tpu_custom_call.1} parent=0
    _
  %s8 = ssub.s32 1, %s6
  %s9 = scalar_select 0, %s8, %s6
  $region1: #{tpu_custom_call.1} parent=0
    #allocation4 [shape = 'u8[32768]{0}', space=vmem, size = 0x8000, scoped, tag = 'input window, operand 1, single buffered']
    #allocation5 [shape = 's32[1]{0}', space=sflag, size = 0x4, scoped, tag = 'scoped memory for tpu_custom_call.1']
    #allocation6 [shape = 's32[1]{0}', space=sflag, size = 0x4, scoped, tag = 'scoped memory for tpu_custom_call.1']
    #allocation7 [shape = 'u8[4096]{0}', space=vmem, size = 0x1000, scoped, tag = 'output window, operand 0, single buffered']
    %10 = vsyncpa [#allocation5], 0
    %11 = vsyncpa [#allocation6], 0
    // Predicated region
    $region2: #{tpu_custom_call.1} parent=1 // pred_check
      _
    $region3: #{tpu_custom_call.1} parent=1 // pred_check_branch
      %13 = sbr.rel (0) target = $region5
    $region4: #{tpu_custom_call.1} parent=1 // pred_region
      _
    $region5: #{tpu_custom_call.1} parent=1 // pred_fallthru
      _
    // Predicated region
    $region6: #{tpu_custom_call.1} parent=1 // pred_check
      _
    $region7: #{tpu_custom_call.1} parent=1 // pred_check_branch
      %15 = sbr.rel (0) target = $region9
    $region8: #{tpu_custom_call.1} parent=1 // pred_region
      %s17 = ssub.s32 1024, 1024
      %18 = vsyncadd [#allocation5], %s17
      %s19 = sshll.u32 [#allocation4], 4
      %s20 = int_to_ptr.vmem [resolvable:$true] %s19
      %25 = dma.hbm_to_vmem [thread:$0]  %s1, 1024, %s20, [#allocation5], 64, 64, 4
    $region9: #{tpu_custom_call.1} parent=1 // pred_fallthru
      _
    // Predicated region
    $region10: #{tpu_custom_call.1} parent=1 // pred_check
      _
    $region11: #{tpu_custom_call.1} parent=1 // pred_check_branch
      %27 = sbr.rel (0) target = $region13
    $region12: #{tpu_custom_call.1} parent=1 // pred_region
      _
    $region13: #{tpu_custom_call.1} parent=1 // pred_fallthru
      _
    // Predicated region
    $region14: #{tpu_custom_call.1} parent=1 // pred_check
      _
    $region15: #{tpu_custom_call.1} parent=1 // pred_check_branch
      %29 = sbr.rel (0) target = $region17
    $region16: #{tpu_custom_call.1} parent=1 // pred_region
      _
    $region17: #{tpu_custom_call.1} parent=1 // pred_fallthru
      _
    // Predicated region
    $region18: #{tpu_custom_call.1} parent=1 // pred_check
      _
    $region19: #{tpu_custom_call.1} parent=1 // pred_check_branch
      %31 = sbr.rel (0) target = $region21
    $region20: #{tpu_custom_call.1} parent=1 // pred_region
      _
    $region21: #{tpu_custom_call.1} parent=1 // pred_fallthru
      _
    // Predicated region
    $region22: #{tpu_custom_call.1} parent=1 // pred_check
      _
    $region23: #{tpu_custom_call.1} parent=1 // pred_check_branch
      %33 = sbr.rel (0) target = $region25
    $region24: #{tpu_custom_call.1} parent=1 // pred_region
      %34 = dma.done [#allocation5], 1024
    $region25: #{tpu_custom_call.1} parent=1 // pred_fallthru
      _
    %p36 = scmp.eq.s32.totalorder 0, 0
    // Predicated region
    $region26: #{tpu_custom_call.1} parent=1 // pred_check
      %p37 = pneg %p36
    $region27: #{tpu_custom_call.1} parent=1 // pred_check_branch
      %39 = sbr.rel (%p37) target = $region29
    $region28: #{tpu_custom_call.1} parent=1 // pred_region
      %v40 = vld [vmem:[%s0] sm:$0xf]
      %v41 = vunpack.c.l.bf16 %v40
      %v42 = vld [vmem:[%s2] sm:$0xf]
      %v43 = vunpack.c.l.bf16 %v42
      %v44 = vmul.f32 %v41, %v43
      %45 = vadd.xlane.f32.xlu0 %v44
      %v46 = vpop.xlane.xlu0 %45
      %vm47 = vcmask 7168
      %48 = vst.msk [vmem:[#allocation2] sm:$0xff] %vm47, %v46
      %49 = vst [vmem:[#allocation3] sm:$0xff] 0.0
    $region29: #{tpu_custom_call.1} parent=1 // pred_fallthru
      _
    %v50 = vld [vmem:[%s0] sm:$0xf]
    %v51 = vld [vmem:[#allocation4] sm:$0xf]
    %v52 = vld [vmem:[#allocation4 + $0x4] sm:$0xf]
    %v53 = vld [vmem:[#allocation4 + $0x8] sm:$0xf]
    %v54 = vld [vmem:[#allocation4 + $0xc] sm:$0xf]
    %v55 = vld [vmem:[#allocation4 + $0x10] sm:$0xf]
    %v56 = vld [vmem:[#allocation4 + $0x14] sm:$0xf]
    %v57 = vld [vmem:[#allocation4 + $0x18] sm:$0xf]
    %v58 = vld [vmem:[#allocation4 + $0x1c] sm:$0xf]
    %v59 = vld [vmem:[#allocation4 + $0x20] sm:$0xf]
    %v60 = vld [vmem:[#allocation4 + $0x24] sm:$0xf]
    %v61 = vld [vmem:[#allocation4 + $0x28] sm:$0xf]
    %v62 = vld [vmem:[#allocation4 + $0x2c] sm:$0xf]
    %v63 = vld [vmem:[#allocation4 + $0x30] sm:$0xf]
    %v64 = vld [vmem:[#allocation4 + $0x34] sm:$0xf]
    %v65 = vld [vmem:[#allocation4 + $0x38] sm:$0xf]
    %v66 = vld [vmem:[#allocation4 + $0x3c] sm:$0xf]
    %v67 = vld [vmem:[%s3] sm:$0xff]
    %v68 = vld [vmem:[%s4] sm:$0x1]
    %v69 = vlaneseq
    %v70 = vshrl.u32 %v69, 7
    %v71 = vsub.s32 0, %v70
    %v72 = vrot.slane %v68, %v71
    %73 = vset.pattern.permute.xlu0 0
    %74 = vperm.xlu0 %73, %v67
    %v75 = vpop.permute.xlu0 %74
    %vm76 = vcmp.ne.s32.totalorder %v72, %v75
    %vm77 = vcmp.ge.s32.totalorder %v68, 0
    %v78 = vsel %vm77, 1, 0
    %v79 = vlaneseq
    %v80 = vshrl.u32 %v79, 7
    %v81 = vsub.s32 0, %v80
    %v82 = vrot.slane %v78, %v81
    %vm83 = vcmp.eq.s32.totalorder %v82, 1
    %vm84 = vmand %vm76, %vm83
    %vm85 = vcmp.ge.s32.totalorder %v67, 0
    %v86 = vsel %vm85, 1, 0
    %87 = vset.pattern.permute.xlu0 0
    %88 = vperm.xlu0 %87, %v86
    %v89 = vpop.permute.xlu0 %88
    %vm90 = vcmp.eq.s32.totalorder %v89, 1
    %vm91 = vmand %vm84, %vm90
    %v108 = vunpack.c.l.b16 %v51
    %v109 = vunpack.c.l.b16 %v52
    %v110 = vunpack.c.l.b16 %v53
    %v111 = vunpack.c.l.b16 %v54
    %v112 = vunpack.c.l.b16 %v55
    %v113 = vunpack.c.l.b16 %v56
    %v114 = vunpack.c.l.b16 %v57
    %v115 = vunpack.c.l.b16 %v58
    %v116 = vunpack.c.l.b16 %v59
    %v117 = vunpack.c.l.b16 %v60
    %v118 = vunpack.c.l.b16 %v61
    %v119 = vunpack.c.l.b16 %v62
    %v120 = vunpack.c.l.b16 %v63
    %v121 = vunpack.c.l.b16 %v64
    %v122 = vunpack.c.l.b16 %v65
    %v123 = vunpack.c.l.b16 %v66
    %v124 = vpack.c.b16 %v109, %v108
    %v125 = vpack.c.b16 %v111, %v110
    %v126 = vpack.c.b16 %v113, %v112
    %v127 = vpack.c.b16 %v115, %v114
    %v128 = vpack.c.b16 %v117, %v116
    %v129 = vpack.c.b16 %v119, %v118
    %v130 = vpack.c.b16 %v121, %v120
    %v131 = vpack.c.b16 %v123, %v122
    %140 = vmatprep.subr.bf16.mxu0 0
    %141 = vmatpush1.bf16.msra.mxu0 %v131
    %142 = vmatprep.subr.bf16.mxu0 0
    %143 = vmatpush1.bf16.msra.mxu0 %v130
    %144 = vmatprep.subr.bf16.mxu0 0
    %145 = vmatpush1.bf16.msra.mxu0 %v129
    %146 = vmatprep.subr.bf16.mxu0 0
    %147 = vmatpush1.bf16.msra.mxu0 %v128
    %148 = vmatprep.subr.bf16.mxu0 0
    %149 = vmatpush1.bf16.msra.mxu0 %v127
    %150 = vmatprep.subr.bf16.mxu0 0
    %151 = vmatpush1.bf16.msra.mxu0 %v126
    %152 = vmatprep.subr.bf16.mxu0 0
    %153 = vmatpush1.bf16.msra.mxu0 %v125
    %154 = vmatprep.subr.bf16.mxu0 0
    %155 = vmatpush1.bf16.msra.mxu0 %v124
    %156 = vmatprep.subr.bf16.mxu0 0
    %157 = vmatpush2.bf16.msra.mxu0 0
    %158 = vmatprep.subr.bf16.mxu0 0
    %159 = vmatpush2.bf16.msra.mxu0 0
    %160 = vmatprep.subr.bf16.mxu0 0
    %161 = vmatpush2.bf16.msra.mxu0 0
    %162 = vmatprep.subr.bf16.mxu0 0
    %163 = vmatpush2.bf16.msra.mxu0 0
    %164 = vmatprep.subr.bf16.mxu0 0
    %165 = vmatpush2.bf16.msra.mxu0 0
    %166 = vmatprep.subr.bf16.mxu0 0
    %167 = vmatpush2.bf16.msra.mxu0 0
    %168 = vmatprep.subr.bf16.mxu0 0
    %169 = vmatpush2.bf16.msra.mxu0 0
    %170 = vmatprep.subr.bf16.mxu0 0
    %171 = vmatpush2.bf16.msra.mxu0 0
    %172 = vmatprep.mubr.bf16.mxu0 0
    %173 = vmatmul.mubr.bf16.gmra.mxu0 %v50
    %v174 = vpop.f32.mrf.mxu0
    %v175 = vadd.f32 1.0, %v174
    %v176 = vpop.f32.mrf.mxu0
    %v177 = vpop.f32.mrf.mxu0
    %v178 = vpop.f32.mrf.mxu0
    %179 = vdwg.mxu0
    %v180 = vld [vmem:[#allocation2] sm:$0xff]
    %182 = vset.pattern.permute.xlu0 0
    %183 = vperm.xlu0 %182, %v180
    %v184 = vpop.permute.xlu0 %183
    %v186 = vsub.f32 %v175, %v184
    %v187 = vmax.f32 %v186, 0.0
    %v188 = vsel %vm91, %v187, 0.0
    %v189 = vld [vmem:[#allocation3] sm:$0xff]
    %v190 = vadd.f32 %v189, %v188
    %191 = vst [vmem:[#allocation3] sm:$0xff] %v190
    // Predicated region
    $region30: #{tpu_custom_call.1} parent=1 // pred_check
      %p192 = pneg %p36
    $region31: #{tpu_custom_call.1} parent=1 // pred_check_branch
      %194 = sbr.rel (%p192) target = $region33
    $region32: #{tpu_custom_call.1} parent=1 // pred_region
      %v195 = vld [vmem:[#allocation3] sm:$0xff]
      %196 = vst [vmem:[#allocation7] sm:$0xff] %v195
    $region33: #{tpu_custom_call.1} parent=1 // pred_fallthru
      _
    // Predicated region
    $region34: #{tpu_custom_call.1} parent=1 // pred_check
      _
    $region35: #{tpu_custom_call.1} parent=1 // pred_check_branch
      %198 = sbr.rel (0) target = $region37
    $region36: #{tpu_custom_call.1} parent=1 // pred_region
      %s200 = ssub.s32 128, 128
      %201 = vsyncadd [#allocation6], %s200
      %s203 = sshll.u32 [#allocation7], 4
      %s204 = int_to_ptr.vmem [resolvable:$true] %s203
      %206 = dma.vmem_to_hbm [thread:$0]  %s204, 128, %s5, [#allocation6]
    $region37: #{tpu_custom_call.1} parent=1 // pred_fallthru
      _
    // Predicated region
    $region38: #{tpu_custom_call.1} parent=1 // pred_check
      _
    $region39: #{tpu_custom_call.1} parent=1 // pred_check_branch
      %208 = sbr.rel (0) target = $region41
    $region40: #{tpu_custom_call.1} parent=1 // pred_region
      %209 = dma.done [#allocation6], 128
    $region41: #{tpu_custom_call.1} parent=1 // pred_fallthru
      _
    %210 = vsyncpa [#allocation5], 1
    %211 = vsyncpa [#allocation6], 1

</llo_original>
